<compile_context>
chip_gen: v6e
topology: v6e:2x2x1
jax: 0.10.0
libtpu: 0.0.40
codegen_flags: <defaults>
</compile_context>

<pallas_src>
import jax
import jax.numpy as jnp
from jax.experimental import pallas as pl
from jax.experimental.pallas import tpu as pltpu

_LANE = 1024                  # lane-dense last dim (multiple of 128)
_DEFAULT_TILE_ROWS = 1024     # 1024 x 1024 f32 = 4 MiB per buffer
_MAX_TILE_ROWS = 2048         # 8 MiB/buffer -> needs the 48 MiB VMEM budget
_MIN_PALLAS_ELEMS = 1 << 18   # below this, plain jnp (XLA fusion) wins


def _round_up(n, m):
    return ((n + m - 1) // m) * m


def _affine_kernel(s_ref, x_ref, o_ref):
    # s_ref: (1, 2) f32 in SMEM -> [a, b] with a = w2*w1*10, b = -w2
    # x_ref / o_ref: (tile_rows, _LANE) f32 tiles in VMEM (2 VALU ops per vreg,
    # fully hidden behind the HBM DMA -> kernel is HBM-bandwidth bound).
    a = s_ref[0, 0]
    b = s_ref[0, 1]
    o_ref[...] = a + b * x_ref[...]


def net_forward(x, w_gap_factor, w_gap_2_flow, *, force_pallas=False, tile_rows=None):
    """x: (..., 1) float32 (PyTorch shape). Returns flow0 with the same shape."""
    assert x.shape[-1] == 1, "nn.Linear(1, 1) requires trailing feature dim of 1"
    orig_shape = x.shape
    total = int(x.size)

    w1 = jnp.asarray(w_gap_factor, jnp.float32).reshape(())
    w2 = jnp.asarray(w_gap_2_flow, jnp.float32).reshape(())
    # Hoisted scalar math: w2 * (w1*10 - x) == a + b*x
    a = w2 * w1 * 10.0
    b = -w2

    pad_elems = (-total) % _LANE

    # jnp fallback: a fused 2-op elementwise chain is already at the HBM roofline
    # with no pad/slice/launch overhead, so only sizeable, low-padding inputs
    # take the Pallas path by default.
    if not force_pallas and (total < _MIN_PALLAS_ELEMS or pad_elems * 10 > total):
        return (a + b * x.astype(jnp.float32)).reshape(orig_shape)

    # --- lane-dense (rows, _LANE) view; pad only the final partial lane-row -----
    flat = x.reshape(-1).astype(jnp.float32)
    rows = pl.cdiv(total, _LANE)
    if pad_elems:
        flat = jnp.pad(flat, (0, pad_elems))     # ragged sizes only, < 4 KiB of pad
    x2d = flat.reshape(rows, _LANE)

    # --- tile-row selection ------------------------------------------------------
    if rows <= 8:
        tr = rows                                # single full-extent block (tiny input)
    else:
        tr = _DEFAULT_TILE_ROWS if tile_rows is None else int(tile_rows)
        tr = min(_MAX_TILE_ROWS, max(8, _round_up(tr, 8)))
        if pl.cdiv(rows, tr) < 2:
            # Guarantee >= 2 grid steps so "parallel" can shard across v7x's 2 TCs.
            tr = _round_up(pl.cdiv(rows, 2), 8)
    grid = (pl.cdiv(rows, tr),)                  # Pallas masks the last partial block

    # Double-buffered in + out tiles: 16 MiB at tr=1024, 32 MiB at tr=2048.
    vmem_limit = (48 if tr > 1024 else 32) * 1024 * 1024

    scalars = jnp.stack([a, b]).reshape(1, 2)    # single SMEM operand: [a, b]

    out2d = pl.pallas_call(
        _affine_kernel,
        out_shape=jax.ShapeDtypeStruct((rows, _LANE), jnp.float32),
        grid=grid,
        in_specs=[
            pl.BlockSpec(memory_space=pltpu.MemorySpace.SMEM),
            pl.BlockSpec((tr, _LANE), lambda i: (i, 0)),
        ],
        out_specs=pl.BlockSpec((tr, _LANE), lambda i: (i, 0)),
        compiler_params=pltpu.CompilerParams(
            dimension_semantics=("parallel",),   # shard row tiles across TCs (v7x)
            vmem_limit_bytes=vmem_limit,
        ),
    )(scalars, x2d)

    if pad_elems:
        # Keep the strip so callers never see the masked/padded tail.
        return out2d.reshape(-1)[:total].reshape(orig_shape)
    return out2d.reshape(orig_shape)             # zero-copy fast path: no pad, no slice


if __name__ == "__main__":
    key = jax.random.PRNGKey(0)
    kx, k1, k2, kx2, kx3 = jax.random.split(key, 5)

    # Parameters matching nn.Linear(1, 1, bias=False): weight shape (1, 1)
    w_gap_factor = jax.random.uniform(k1, (1, 1), jnp.float32, -1.0, 1.0)
    w_gap_2_flow = jax.random.uniform(k2, (1, 1), jnp.float32, -1.0, 1.0)

    def ref_fn(xx):
        return w_gap_2_flow[0, 0] * (w_gap_factor[0, 0] * 10.0 - xx)

    # Test 1: small shape consistent with the module (trailing feature dim = 1),
    # forcing Pallas: ragged -> single padded lane-row, grid = 1, full-extent block.
    B, N = 2, 8
    x_small = jax.random.normal(kx, (B, N, 1), jnp.float32)
    out_small = jax.block_until_ready(
        net_forward(x_small, w_gap_factor, w_gap_2_flow, force_pallas=True))
    assert out_small.shape == (B, N, 1)
    assert jnp.allclose(out_small, ref_fn(x_small), atol=1e-5, rtol=1e-5)

    # Test 2: ragged multi-tile grid with a masked non-divisible last block:
    # 27000 elems -> 27 lane-rows, tile_rows=8 -> grid=4, last block = 3 valid rows.
    x_multi = jax.random.normal(kx2, (3, 9000, 1), jnp.float32)
    out_multi = jax.block_until_ready(
        net_forward(x_multi, w_gap_factor, w_gap_2_flow,
                    force_pallas=True, tile_rows=8))
    assert out_multi.shape == x_multi.shape
    assert jnp.allclose(out_multi, ref_fn(x_multi), atol=1e-5, rtol=1e-5)

    # Test 3: lane-divisible zero-copy fast path (no pad, no slice) and the forced
    # >= 2-step grid for v7x megacore (rows=16 -> tr=8 -> grid=2).
    x_div = jax.random.normal(kx3, (16, 1024, 1), jnp.float32)
    out_div = jax.block_until_ready(
        net_forward(x_div, w_gap_factor, w_gap_2_flow, force_pallas=True))
    assert out_div.shape == x_div.shape
    assert jnp.allclose(out_div, ref_fn(x_div), atol=1e-5, rtol=1e-5)

    # Test 4: default heuristic fallback (small input, no force) — pure jnp path.
    out_fb = jax.block_until_ready(net_forward(x_small, w_gap_factor, w_gap_2_flow))
    assert jnp.allclose(out_fb, ref_fn(x_small), atol=1e-5, rtol=1e-5)

    print("KERNEL_OK")
</pallas_src>

<mosaic_0001>
module attributes {stable_mosaic.version = 11 : i64} {
  func.func @_affine_kernel(%arg0: i32, %arg1: memref<1x2xf32, #tpu.memory_space<smem>>, %arg2: memref<1x1024xf32, #tpu.memory_space<vmem>>, %arg3: memref<1x1024xf32, #tpu.memory_space<vmem>>) attributes {dimension_semantics = [#tpu.dimension_semantics<parallel>], iteration_bounds = array<i64: 1>, scalar_prefetch = 0 : i64, scratch_operands = 0 : i64, tpu.core_type = #tpu.core_type<tc>, window_params = [{transform_indices = @transform_0, window_bounds = array<i64: 1, 2>}, {transform_indices = @transform_1, window_bounds = array<i64: 1, 1024>}, {transform_indices = @transform_2, window_bounds = array<i64: 1, 1024>}]} {
    %c0 = arith.constant 0 : index
    %c0_0 = arith.constant 0 : index
    %0 = memref.load %arg1[%c0, %c0_0] : memref<1x2xf32, #tpu.memory_space<smem>>
    %c0_1 = arith.constant 0 : index
    %c1 = arith.constant 1 : index
    %1 = memref.load %arg1[%c0_1, %c1] : memref<1x2xf32, #tpu.memory_space<smem>>
    %c0_2 = arith.constant 0 : index
    %c0_3 = arith.constant 0 : index
    %2 = vector.load %arg2[%c0_2, %c0_3] : memref<1x1024xf32, #tpu.memory_space<vmem>>, vector<1x1024xf32>
    %3 = vector.broadcast %1 : f32 to vector<1x1024xf32>
    %4 = arith.mulf %3, %2 : vector<1x1024xf32>
    %5 = vector.broadcast %0 : f32 to vector<1x1024xf32>
    %6 = arith.addf %5, %4 : vector<1x1024xf32>
    %c0_4 = arith.constant 0 : index
    %c0_5 = arith.constant 0 : index
    %7 = vector.load %arg3[%c0_4, %c0_5] : memref<1x1024xf32, #tpu.memory_space<vmem>>, vector<1x1024xf32>
    tpu.vector_store %arg3[%c0_4, %c0_5], %6 {strides = array<i32>} : memref<1x1024xf32, #tpu.memory_space<vmem>>, vector<1x1024xf32>,
    return
  }
  func.func @transform_0(%arg0: i32) -> (i32, i32) {
    %c0_i32 = arith.constant 0 : i32
    %c0_i32_0 = arith.constant 0 : i32
    %c0_i32_1 = arith.constant 0 : i32
    return %c0_i32, %c0_i32_0 : i32, i32
  }
  func.func @transform_1(%arg0: i32) -> (i32, i32) {
    %c0_i32 = arith.constant 0 : i32
    %c0_i32_0 = arith.constant 0 : i32
    return %arg0, %c0_i32 : i32, i32
  }
  func.func @transform_2(%arg0: i32) -> (i32, i32) {
    %c0_i32 = arith.constant 0 : i32
    %c0_i32_0 = arith.constant 0 : i32
    return %arg0, %c0_i32 : i32, i32
  }
}

</mosaic_0001>

<llo_original>
// kernel: tpu_custom_call.1
$region0: #{tpu_custom_call.1}
  #allocation0 [shape = 'u32[]', space=smem, size = 0x4, offset = 0x4, fixed_abs, tag = 'smem constant byte address 0x4 - core index']
  #allocation1 [shape = 'u32[144,128]{1,0:T(1,128)}', space=vmem, size = 0x12000, scoped, tag = 'internal scratch']
  %s0 = inlined_call_operand.hbm [shape: f32[1,2], index: 0, kind: input, shape index: {}]
  %s1 = inlined_call_operand.hbm [shape: f32[1,1024], index: 1, kind: input, shape index: {}]
  %s2 = inlined_call_operand.hbm [shape: f32[1,1024], index: 2, kind: output, shape index: {}]
  %s3 = sld [smem:[#allocation0]]
  $region26: #{tpu_custom_call.1} parent=0
    _
  %s5 = ssub.s32 1, %s3
  %s6 = scalar_select 0, %s5, %s3
  $region1: #{tpu_custom_call.1} parent=0
    #allocation2 [shape = 'u8[512]{0}', space=smem, size = 0x200, scoped, tag = 'input window, operand 0, single buffered']
    #allocation3 [shape = 's32[1]{0}', space=sflag, size = 0x4, scoped, tag = 'scoped memory for tpu_custom_call.1']
    #allocation4 [shape = 's32[1]{0}', space=sflag, size = 0x4, scoped, tag = 'scoped memory for tpu_custom_call.1']
    #allocation5 [shape = 's32[1]{0}', space=sflag, size = 0x4, scoped, tag = 'scoped memory for tpu_custom_call.1']
    #allocation6 [shape = 'u8[4096]{0}', space=vmem, size = 0x1000, scoped, tag = 'input window, operand 1, single buffered']
    #allocation7 [shape = 'u8[4096]{0}', space=vmem, size = 0x1000, scoped, tag = 'output window, operand 0, single buffered']
    %7 = vsyncpa [#allocation5], 0
    %8 = vsyncpa [#allocation3], 0
    %9 = vsyncpa [#allocation4], 0
    // Predicated region
    $region2: #{tpu_custom_call.1} parent=1 // pred_check
      _
    $region3: #{tpu_custom_call.1} parent=1 // pred_check_branch
      %11 = sbr.rel (0) target = $region5
    $region4: #{tpu_custom_call.1} parent=1 // pred_region
      %s13 = ssub.s32 16, 16
      %14 = vsyncadd [#allocation5], %s13
      %17 = dma.hbm_to_smem %s0, 16, [#allocation2], [#allocation5]
    $region5: #{tpu_custom_call.1} parent=1 // pred_fallthru
      _
    // Predicated region
    $region6: #{tpu_custom_call.1} parent=1 // pred_check
      _
    $region7: #{tpu_custom_call.1} parent=1 // pred_check_branch
      %19 = sbr.rel (0) target = $region9
    $region8: #{tpu_custom_call.1} parent=1 // pred_region
      %s21 = ssub.s32 128, 128
      %22 = vsyncadd [#allocation3], %s21
      %s24 = sshll.u32 [#allocation6], 4
      %s25 = int_to_ptr.vmem [resolvable:$true] %s24
      %27 = dma.hbm_to_vmem [thread:$0]  %s1, 128, %s25, [#allocation3]
    $region9: #{tpu_custom_call.1} parent=1 // pred_fallthru
      _
    // Predicated region
    $region10: #{tpu_custom_call.1} parent=1 // pred_check
      _
    $region11: #{tpu_custom_call.1} parent=1 // pred_check_branch
      %29 = sbr.rel (0) target = $region13
    $region12: #{tpu_custom_call.1} parent=1 // pred_region
      %30 = dma.done [#allocation5], 16
    $region13: #{tpu_custom_call.1} parent=1 // pred_fallthru
      _
    // Predicated region
    $region14: #{tpu_custom_call.1} parent=1 // pred_check
      _
    $region15: #{tpu_custom_call.1} parent=1 // pred_check_branch
      %32 = sbr.rel (0) target = $region17
    $region16: #{tpu_custom_call.1} parent=1 // pred_region
      %33 = dma.done [#allocation3], 128
    $region17: #{tpu_custom_call.1} parent=1 // pred_fallthru
      _
    %34 = sfence
    %s35 = sld [smem:[#allocation2]]
    %s36 = sld [smem:[#allocation2 + $0x1]]
    %v37 = vld [vmem:[#allocation6] sm:$0xff]
    %v38 = vstv %s36
    %v39 = vmul.f32 %v38, %v37
    %v40 = vstv %s35
    %v41 = vadd.f32 %v40, %v39
    %42 = vst [vmem:[#allocation7] sm:$0xff] %v41
    // Predicated region
    $region18: #{tpu_custom_call.1} parent=1 // pred_check
      _
    $region19: #{tpu_custom_call.1} parent=1 // pred_check_branch
      %44 = sbr.rel (0) target = $region21
    $region20: #{tpu_custom_call.1} parent=1 // pred_region
      %s46 = ssub.s32 128, 128
      %47 = vsyncadd [#allocation4], %s46
      %s49 = sshll.u32 [#allocation7], 4
      %s50 = int_to_ptr.vmem [resolvable:$true] %s49
      %52 = dma.vmem_to_hbm [thread:$0]  %s50, 128, %s2, [#allocation4]
    $region21: #{tpu_custom_call.1} parent=1 // pred_fallthru
      _
    // Predicated region
    $region22: #{tpu_custom_call.1} parent=1 // pred_check
      _
    $region23: #{tpu_custom_call.1} parent=1 // pred_check_branch
      %54 = sbr.rel (0) target = $region25
    $region24: #{tpu_custom_call.1} parent=1 // pred_region
      %55 = dma.done [#allocation4], 128
    $region25: #{tpu_custom_call.1} parent=1 // pred_fallthru
      _
    %56 = vsyncpa [#allocation3], 1
    %57 = vsyncpa [#allocation4], 1
    %58 = vsyncpa [#allocation5], 1

</llo_original>
